<compile_context>
chip_gen: v7x
topology: tpu7x:2x2x1
jax: 0.10.0
libtpu: 0.0.40
codegen_flags: <defaults>
</compile_context>

<pallas_src>
import functools

import jax
import jax.numpy as jnp
from jax import lax
from jax.experimental import pallas as pl
from jax.experimental.pallas import tpu as pltpu

LANE = 128           # vreg lane width (last dim)
SUBLANE = 8          # vreg sublane count (second-to-last dim)
ACC_ROWS_PREF = 64   # 8 output vregs -> enough ILP in the per-step tree reduce


def _chip_config():
    """(num_tensorcores, target f32-block bytes per input) by TPU generation."""
    try:
        kind = jax.devices()[0].device_kind.lower()
    except Exception:
        kind = ""
    if "v7" in kind or "7x" in kind:
        return 2, 4 << 20      # v7x: 2 TCs, ~3.2 TB/s HBM -> 4 MiB blocks
    if "v6" in kind:
        return 1, 2 << 20      # v6e: 1 TC, ~1.4 TB/s -> 2 MiB blocks
    return 1, 1 << 20          # v5e / unknown: 1 MiB blocks (16 MiB scoped VMEM)


def _wmse_kernel(x_ref, t_ref, o_ref, acc_ref, *, is_relu, rows, tile_rows,
                 acc_rows, blocks_per_core, num_blocks, even_split):
    c = pl.program_id(0)           # core / partial-sum index ("parallel")
    i = pl.program_id(1)           # row-block index within this core
    blk = c * blocks_per_core + i  # global row-block index (un-clamped)

    @pl.when(i == 0)
    def _init():
        acc_ref[...] = jnp.zeros_like(acc_ref)

    def _accumulate(mask_last_block):
        div = t_ref[...].astype(jnp.float32) - x_ref[...].astype(jnp.float32)
        if is_relu:
            div = jnp.maximum(div, 0.0)
        sq = div * div
        if mask_last_block:
            # Only the globally-last block is ragged vs. the grid; mask the
            # Pallas row padding there.  This path is gated by pl.when below,
            # so the iota/compare/select is never paid on the hot full blocks.
            row_ids = blk * tile_rows + lax.broadcasted_iota(
                jnp.int32, sq.shape, 0)
            sq = jnp.where(row_ids < rows, sq, 0.0)
        if acc_rows != tile_rows:
            # Tree-reduce to a tiny (acc_rows, 128) partial: pure VPU adds, no
            # full-tile accumulator read-modify-write (saves vld/vst slots and
            # multiple MiB of VMEM).
            sq = sq.reshape(tile_rows // acc_rows, acc_rows, LANE).sum(axis=0)
        acc_ref[...] += sq

    ragged = (num_blocks * tile_rows != rows)      # static
    if ragged:
        # num_blocks >= 2 here.  Duplicate clamped blocks (blk >= num_blocks,
        # uneven core split) match neither predicate and are skipped.
        pl.when(blk < num_blocks - 1)(lambda: _accumulate(False))
        pl.when(blk == num_blocks - 1)(lambda: _accumulate(True))
    elif even_split:
        _accumulate(False)
    else:
        pl.when(blk < num_blocks)(lambda: _accumulate(False))

    @pl.when(i == blocks_per_core - 1)
    def _finalize():
        # Single cross-lane/sublane reduction per core, broadcast over a
        # lane-dense (8, 128) output block.
        o_ref[...] = jnp.full((SUBLANE, LANE), jnp.sum(acc_ref[...]),
                              dtype=jnp.float32)


def weight_mse_loss(inputs, target, isReLU: bool = False):
    """Pallas TPU implementation of WeightMSELoss.forward."""
    x = jnp.ravel(inputs)
    t = jnp.ravel(target)
    n = x.shape[0]
    if n == 0:
        return jnp.float32(0.0)

    # Handle the < 128-element ragged tail in plain JAX (negligible work) so
    # the bulk streams through the kernel without a padded full-tensor copy.
    main = (n // LANE) * LANE
    tail = n - main
    if tail:
        td = t[main:].astype(jnp.float32) - x[main:].astype(jnp.float32)
        if isReLU:
            td = jnp.maximum(td, 0.0)
        tail_sum = jnp.sum(td * td)
        if main == 0:
            return tail_sum
        xm, tm = x[:main], t[:main]
    else:
        tail_sum = None
        xm, tm = x, t

    rows = main // LANE
    x2 = xm.reshape(rows, LANE)
    t2 = tm.reshape(rows, LANE)

    num_cores, block_bytes_target = _chip_config()
    itemsize = max(x2.dtype.itemsize, t2.dtype.itemsize)
    cap_rows = max(SUBLANE,
                   (block_bytes_target // (LANE * itemsize)) // SUBLANE * SUBLANE)

    # tile_rows is a multiple of 8 whenever rows >= 8; any leftover rows land
    # in a masked ragged last block.
    if rows >= cap_rows:
        tile_rows = cap_rows
    elif rows >= SUBLANE:
        tile_rows = (rows // SUBLANE) * SUBLANE
    else:
        tile_rows = rows

    num_blocks = pl.cdiv(rows, tile_rows)
    num_cores = min(num_cores, num_blocks)   # no duplicate-DMA core for tiny inputs
    blocks_per_core = pl.cdiv(num_blocks, num_cores)
    even_split = (num_cores * blocks_per_core == num_blocks)
    grid = (num_cores, blocks_per_core)

    if tile_rows % ACC_ROWS_PREF == 0:
        acc_rows = ACC_ROWS_PREF
    elif tile_rows % SUBLANE == 0:
        acc_rows = SUBLANE
    else:
        acc_rows = tile_rows          # tiny (< 8-row) single-block input

    if even_split:
        def in_map(c, i):
            return (c * blocks_per_core + i, 0)
    else:
        def in_map(c, i):
            # Clamp so a core with fewer real blocks re-reads a valid block;
            # its contribution is skipped inside the kernel.
            return (jnp.minimum(c * blocks_per_core + i, num_blocks - 1), 0)

    in_spec = pl.BlockSpec((tile_rows, LANE), in_map)
    out_spec = pl.BlockSpec((SUBLANE, LANE), lambda c, i: (c, 0))

    kernel = functools.partial(
        _wmse_kernel,
        is_relu=bool(isReLU),
        rows=rows,
        tile_rows=tile_rows,
        acc_rows=acc_rows,
        blocks_per_core=blocks_per_core,
        num_blocks=num_blocks,
        even_split=even_split,
    )

    # 2 inputs x 2 pipeline buffers + tiny acc/out, plus headroom.
    block_bytes = tile_rows * LANE * itemsize
    vmem_limit = int(min(64 << 20, max(8 << 20, 5 * block_bytes + (2 << 20))))

    flops = (4 if isReLU else 3) * main
    bytes_accessed = 2 * main * itemsize + num_cores * SUBLANE * LANE * 4

    out = pl.pallas_call(
        kernel,
        out_shape=jax.ShapeDtypeStruct((num_cores * SUBLANE, LANE), jnp.float32),
        grid=grid,
        in_specs=[in_spec, in_spec],
        out_specs=out_spec,
        scratch_shapes=[pltpu.VMEM((acc_rows, LANE), jnp.float32)],
        compiler_params=pltpu.CompilerParams(
            dimension_semantics=("parallel", "arbitrary"),
            vmem_limit_bytes=vmem_limit,
        ),
        cost_estimate=pl.CostEstimate(
            flops=flops, transcendentals=0, bytes_accessed=bytes_accessed),
    )(x2, t2)

    # Per-core partial sums live at rows 0, 8, ... of the output slab.
    loss = jnp.sum(out[::SUBLANE, 0])
    if tail:
        loss = loss + tail_sum
    return loss


def _reference(inputs, target, isReLU=False):
    div = (target.astype(jnp.float32) - inputs.astype(jnp.float32)).reshape(-1)
    if isReLU:
        div = jnp.maximum(div, 0.0)
    return jnp.sum(div * div)


def _check(x, y, rtol):
    for relu in (False, True):
        got = weight_mse_loss(x, y, isReLU=relu)
        jax.block_until_ready(got)
        ref = _reference(x, y, isReLU=relu)
        assert jnp.allclose(got, ref, rtol=rtol, atol=1e-3), (relu, got, ref)


if __name__ == "__main__":
    key = jax.random.PRNGKey(0)
    k1, k2, k3, k4, k5, k6 = jax.random.split(key, 6)

    # Small conv-like (NCHW) shape: lane-aligned, single-block path.
    x = jax.random.normal(k1, (2, 4, 16, 16), dtype=jnp.float32)
    y = jax.random.normal(k2, (2, 4, 16, 16), dtype=jnp.float32)
    _check(x, y, rtol=1e-5)

    # Ragged flat length (not a multiple of 128): plain-JAX tail path.
    xr = jax.random.normal(k3, (3, 5, 7, 11), dtype=jnp.float32)
    yr = jax.random.normal(k4, (3, 5, 7, 11), dtype=jnp.float32)
    _check(xr, yr, rtol=1e-5)

    # Multi-block + gated last-block mask (+ core split / skip path on v7x).
    xb = jax.random.normal(k5, (4100, 130), dtype=jnp.float32)
    yb = jax.random.normal(k6, (4100, 130), dtype=jnp.float32)
    _check(xb, yb, rtol=1e-4)

    print("KERNEL_OK")
</pallas_src>

<mosaic_0001>
module attributes {stable_mosaic.version = 11 : i64} {
  func.func @_wmse_kernel(%arg0: i32, %arg1: i32, %arg2: memref<16x128xf32, #tpu.memory_space<vmem>>, %arg3: memref<16x128xf32, #tpu.memory_space<vmem>>, %arg4: memref<8x128xf32, #tpu.memory_space<vmem>>, %arg5: memref<8x128xf32, #tpu.memory_space<vmem>>) attributes {dimension_semantics = [#tpu.dimension_semantics<parallel>, #tpu.dimension_semantics<arbitrary>], iteration_bounds = array<i64: 1, 1>, scalar_prefetch = 0 : i64, scratch_operands = 1 : i64, tpu.core_type = #tpu.core_type<tc>, window_params = [{transform_indices = @transform_0, window_bounds = array<i64: 16, 128>}, {transform_indices = @transform_1, window_bounds = array<i64: 16, 128>}, {transform_indices = @transform_2, window_bounds = array<i64: 8, 128>}]} {
    %c0_i32 = arith.constant 0 : i32
    %0 = arith.cmpi eq, %arg1, %c0_i32 : i32
    %1 = arith.extui %0 : i1 to i32
    %c0_i32_0 = arith.constant 0 : i32
    %2 = arith.cmpi ne, %1, %c0_i32_0 : i32
    scf.if %2 {
      %cst_10 = arith.constant 0.000000e+00 : f32
      %15 = vector.broadcast %cst_10 : f32 to vector<8x128xf32>
      %c0_11 = arith.constant 0 : index
      %c0_12 = arith.constant 0 : index
      %16 = vector.load %arg5[%c0_11, %c0_12] : memref<8x128xf32, #tpu.memory_space<vmem>>, vector<8x128xf32>
      tpu.vector_store %arg5[%c0_11, %c0_12], %15 {strides = array<i32>} : memref<8x128xf32, #tpu.memory_space<vmem>>, vector<8x128xf32>,
    } else {
    }
    %c0 = arith.constant 0 : index
    %c0_1 = arith.constant 0 : index
    %3 = vector.load %arg3[%c0, %c0_1] : memref<16x128xf32, #tpu.memory_space<vmem>>, vector<16x128xf32>
    %c0_2 = arith.constant 0 : index
    %c0_3 = arith.constant 0 : index
    %4 = vector.load %arg2[%c0_2, %c0_3] : memref<16x128xf32, #tpu.memory_space<vmem>>, vector<16x128xf32>
    %5 = arith.subf %3, %4 : vector<16x128xf32>
    %6 = arith.mulf %5, %5 : vector<16x128xf32>
    %7 = vector.shape_cast %6 : vector<16x128xf32> to vector<2x8x128xf32>
    %cst = arith.constant dense<0.000000e+00> : vector<8x128xf32>
    %8 = vector.multi_reduction <add>, %7, %cst [0] : vector<2x8x128xf32> to vector<8x128xf32>
    %c0_4 = arith.constant 0 : index
    %c0_5 = arith.constant 0 : index
    %9 = vector.load %arg5[%c0_4, %c0_5] : memref<8x128xf32, #tpu.memory_space<vmem>>, vector<8x128xf32>
    %10 = arith.addf %9, %8 : vector<8x128xf32>
    %c0_6 = arith.constant 0 : index
    %c0_7 = arith.constant 0 : index
    %11 = vector.load %arg5[%c0_6, %c0_7] : memref<8x128xf32, #tpu.memory_space<vmem>>, vector<8x128xf32>
    tpu.vector_store %arg5[%c0_6, %c0_7], %10 {strides = array<i32>} : memref<8x128xf32, #tpu.memory_space<vmem>>, vector<8x128xf32>,
    %c0_i32_8 = arith.constant 0 : i32
    %12 = arith.cmpi eq, %arg1, %c0_i32_8 : i32
    %13 = arith.extui %12 : i1 to i32
    %c0_i32_9 = arith.constant 0 : i32
    %14 = arith.cmpi ne, %13, %c0_i32_9 : i32
    scf.if %14 {
      %c0_10 = arith.constant 0 : index
      %c0_11 = arith.constant 0 : index
      %15 = vector.load %arg5[%c0_10, %c0_11] : memref<8x128xf32, #tpu.memory_space<vmem>>, vector<8x128xf32>
      %16 = vector.shape_cast %15 : vector<8x128xf32> to vector<1x8x128xf32>
      %cst_12 = arith.constant dense<0.000000e+00> : vector<1xf32>
      %17 = vector.multi_reduction <add>, %16, %cst_12 [1, 2] : vector<1x8x128xf32> to vector<1xf32>
      %18 = vector.shape_cast %17 : vector<1xf32> to vector<1x1x1xf32>
      %19 = vector.extract %18[0, 0, 0] : f32 from vector<1x1x1xf32>
      %20 = vector.broadcast %19 : f32 to vector<8x128xf32>
      %c0_13 = arith.constant 0 : index
      %c0_14 = arith.constant 0 : index
      %21 = vector.load %arg4[%c0_13, %c0_14] : memref<8x128xf32, #tpu.memory_space<vmem>>, vector<8x128xf32>
      tpu.vector_store %arg4[%c0_13, %c0_14], %20 {strides = array<i32>} : memref<8x128xf32, #tpu.memory_space<vmem>>, vector<8x128xf32>,
    } else {
    }
    return
  }
  func.func @transform_0(%arg0: i32, %arg1: i32) -> (i32, i32) {
    %c1_i32 = arith.constant 1 : i32
    %0 = arith.muli %arg0, %c1_i32 : i32
    %1 = arith.addi %0, %arg1 : i32
    %c0_i32 = arith.constant 0 : i32
    %c0_i32_0 = arith.constant 0 : i32
    return %1, %c0_i32 : i32, i32
  }
  func.func @transform_1(%arg0: i32, %arg1: i32) -> (i32, i32) {
    %c1_i32 = arith.constant 1 : i32
    %0 = arith.muli %arg0, %c1_i32 : i32
    %1 = arith.addi %0, %arg1 : i32
    %c0_i32 = arith.constant 0 : i32
    %c0_i32_0 = arith.constant 0 : i32
    return %1, %c0_i32 : i32, i32
  }
  func.func @transform_2(%arg0: i32, %arg1: i32) -> (i32, i32) {
    %c0_i32 = arith.constant 0 : i32
    %c0_i32_0 = arith.constant 0 : i32
    return %arg0, %c0_i32 : i32, i32
  }
}

</mosaic_0001>

<llo_original>
// kernel: tpu_custom_call.1
$region0: #{tpu_custom_call.1}
  #allocation0 [shape = 'u32[]', space=smem, size = 0x4, offset = 0x4, fixed_abs, tag = 'smem constant byte address 0x4 - core index']
  #allocation1 [shape = 'u32[144,128]{1,0:T(1,128)}', space=vmem, size = 0x12000, scoped, tag = 'internal scratch']
  #allocation2 [shape = 'f32[8,128]{1,0:T(8,128)}', space=vmem, size = 0x1000, scoped, tag = 'scratch operand']
  %s0 = inlined_call_operand.hbm [shape: f32[16,128], index: 0, kind: input, shape index: {}]
  %s1 = inlined_call_operand.hbm [shape: f32[16,128], index: 1, kind: input, shape index: {}]
  %s2 = inlined_call_operand.hbm [shape: f32[8,128], index: 2, kind: output, shape index: {}]
  %s3 = sld [smem:[#allocation0]]
  $region34: #{tpu_custom_call.1} parent=0
    _
  %s5 = ssub.s32 1, %s3
  %s6 = scalar_select 0, %s5, %s3
  $region1: #{tpu_custom_call.1} parent=0
    #allocation3 [shape = 'u8[8192]{0}', space=vmem, size = 0x2000, scoped, tag = 'input window, operand 0, single buffered']
    #allocation4 [shape = 's32[1]{0}', space=sflag, size = 0x4, scoped, tag = 'scoped memory for tpu_custom_call.1']
    #allocation5 [shape = 's32[1]{0}', space=sflag, size = 0x4, scoped, tag = 'scoped memory for tpu_custom_call.1']
    #allocation6 [shape = 'u8[8192]{0}', space=vmem, size = 0x2000, scoped, tag = 'input window, operand 1, single buffered']
    #allocation7 [shape = 's32[1]{0}', space=sflag, size = 0x4, scoped, tag = 'scoped memory for tpu_custom_call.1']
    #allocation8 [shape = 'u8[4096]{0}', space=vmem, size = 0x1000, scoped, tag = 'output window, operand 0, single buffered']
    %7 = vsyncpa [#allocation4], 0
    %8 = vsyncpa [#allocation7], 0
    %9 = vsyncpa [#allocation5], 0
    // Predicated region
    $region2: #{tpu_custom_call.1} parent=1 // pred_check
      _
    $region3: #{tpu_custom_call.1} parent=1 // pred_check_branch
      %11 = sbr.rel (0) target = $region5
    $region4: #{tpu_custom_call.1} parent=1 // pred_region
      %s12 = sadd.s32 0, 0
      %s13 = smul.u32 2, %s12
      %s15 = ssub.s32 256, 256
      %16 = vsyncadd [#allocation4], %s15
      %s17 = smul.addr %s13, 128
      %s18 = scalar_lea.hbm %s0, %s17
      %s19 = sshll.u32 [#allocation3], 4
      %s20 = int_to_ptr.vmem [resolvable:$true] %s19
      %25 = dma.hbm_to_vmem [thread:$0]  %s18, 256, %s20, [#allocation4], 128, 128, 8
    $region5: #{tpu_custom_call.1} parent=1 // pred_fallthru
      _
    // Predicated region
    $region6: #{tpu_custom_call.1} parent=1 // pred_check
      _
    $region7: #{tpu_custom_call.1} parent=1 // pred_check_branch
      %27 = sbr.rel (0) target = $region9
    $region8: #{tpu_custom_call.1} parent=1 // pred_region
      %s28 = sadd.s32 0, 0
      %s29 = smul.u32 2, %s28
      %s31 = ssub.s32 256, 256
      %32 = vsyncadd [#allocation7], %s31
      %s33 = smul.addr %s29, 128
      %s34 = scalar_lea.hbm %s1, %s33
      %s35 = sshll.u32 [#allocation6], 4
      %s36 = int_to_ptr.vmem [resolvable:$true] %s35
      %41 = dma.hbm_to_vmem [thread:$0]  %s34, 256, %s36, [#allocation7], 128, 128, 8
    $region9: #{tpu_custom_call.1} parent=1 // pred_fallthru
      _
    // Predicated region
    $region10: #{tpu_custom_call.1} parent=1 // pred_check
      _
    $region11: #{tpu_custom_call.1} parent=1 // pred_check_branch
      %43 = sbr.rel (0) target = $region13
    $region12: #{tpu_custom_call.1} parent=1 // pred_region
      %44 = dma.done [#allocation4], 256
    $region13: #{tpu_custom_call.1} parent=1 // pred_fallthru
      _
    // Predicated region
    $region14: #{tpu_custom_call.1} parent=1 // pred_check
      _
    $region15: #{tpu_custom_call.1} parent=1 // pred_check_branch
      %46 = sbr.rel (0) target = $region17
    $region16: #{tpu_custom_call.1} parent=1 // pred_region
      %47 = dma.done [#allocation7], 256
    $region17: #{tpu_custom_call.1} parent=1 // pred_fallthru
      _
    %s48 = sadd.s32 0, 0
    %s49 = smul.u32 2, %s48
    %s50 = sadd.s32 0, 0
    %s51 = smul.u32 2, %s50
    %p52 = scmp.eq.s32.totalorder 0, 0
    // Predicated region
    $region18: #{tpu_custom_call.1} parent=1 // pred_check
      %p53 = pneg %p52
    $region19: #{tpu_custom_call.1} parent=1 // pred_check_branch
      %55 = sbr.rel (%p53) target = $region21
    $region20: #{tpu_custom_call.1} parent=1 // pred_region
      %56 = vst [vmem:[#allocation2] sm:$0xff] 0.0
    $region21: #{tpu_custom_call.1} parent=1 // pred_fallthru
      _
    %v57 = vld [vmem:[#allocation6] sm:$0xff]
    %v58 = vld [vmem:[#allocation6 + $0x8] sm:$0xff]
    %v59 = vld [vmem:[#allocation3] sm:$0xff]
    %v60 = vld [vmem:[#allocation3 + $0x8] sm:$0xff]
    %v61 = vsub.f32 %v57, %v59
    %v62 = vsub.f32 %v58, %v60
    %v63 = vmul.f32 %v61, %v61
    %v64 = vmul.f32 %v62, %v62
    %v65 = vadd.f32 %v63, %v64
    %v66 = vld [vmem:[#allocation2] sm:$0xff]
    %v67 = vadd.f32 %v66, %v65
    %68 = vst [vmem:[#allocation2] sm:$0xff] %v67
    // Predicated region
    $region22: #{tpu_custom_call.1} parent=1 // pred_check
      %p69 = pneg %p52
    $region23: #{tpu_custom_call.1} parent=1 // pred_check_branch
      %71 = sbr.rel (%p69) target = $region25
    $region24: #{tpu_custom_call.1} parent=1 // pred_region
      %v72 = vld [vmem:[#allocation2] sm:$0xff]
      %73 = vadd.xlane.f32.xlu0 %v72
      %v74 = vpop.xlane.xlu0 %73
      %v75 = vrot.slane %v74, 4
      %v76 = vadd.f32 %v74, %v75
      %v77 = vrot.slane %v76, 2
      %v78 = vadd.f32 %v76, %v77
      %v79 = vrot.slane %v78, 1
      %v80 = vadd.f32 %v78, %v79
      %s81 = vtos %v80
      %v82 = vstv %s81
      %83 = vst [vmem:[#allocation8] sm:$0xff] %v82
    $region25: #{tpu_custom_call.1} parent=1 // pred_fallthru
      _
    // Predicated region
    $region26: #{tpu_custom_call.1} parent=1 // pred_check
      _
    $region27: #{tpu_custom_call.1} parent=1 // pred_check_branch
      %85 = sbr.rel (0) target = $region29
    $region28: #{tpu_custom_call.1} parent=1 // pred_region
      %s87 = ssub.s32 128, 128
      %88 = vsyncadd [#allocation5], %s87
      %s90 = sshll.u32 [#allocation8], 4
      %s91 = int_to_ptr.vmem [resolvable:$true] %s90
      %93 = dma.vmem_to_hbm [thread:$0]  %s91, 128, %s2, [#allocation5]
    $region29: #{tpu_custom_call.1} parent=1 // pred_fallthru
      _
    // Predicated region
    $region30: #{tpu_custom_call.1} parent=1 // pred_check
      _
    $region31: #{tpu_custom_call.1} parent=1 // pred_check_branch
      %95 = sbr.rel (0) target = $region33
    $region32: #{tpu_custom_call.1} parent=1 // pred_region
      %96 = dma.done [#allocation5], 128
    $region33: #{tpu_custom_call.1} parent=1 // pred_fallthru
      _
    %97 = vsyncpa [#allocation4], 1
    %98 = vsyncpa [#allocation7], 1
    %99 = vsyncpa [#allocation5], 1

</llo_original>
